<compile_context>
chip_gen: v7x
topology: tpu7x:2x2x1
jax: 0.10.0
libtpu: 0.0.40
codegen_flags: <defaults>
</compile_context>

<pallas_src>
import jax
import jax.numpy as jnp
from jax.experimental import pallas as pl
from jax.experimental.pallas import tpu as pltpu


# Per-(double-buffered)-output-buffer VMEM budget.  8 MiB keeps per-grid-step
# fixed cost (~0.35 us) under ~10% of the tile drain time even at v7x's
# 3.2 TB/s HBM write bandwidth, while 2 x 8 MiB + constant stays well inside
# every generation's physical VMEM once vmem_limit_bytes is raised explicitly.
_TILE_BUDGET_BYTES = 8 * 1024 * 1024

# Below this total output size, pallas_call launch + grid overhead dwarfs the
# single fused write XLA already emits for broadcast_to -> skip Pallas.
_PALLAS_MIN_BYTES = 256 * 1024


def _constant_input_kernel(const_ref, o_ref):
    """const_ref: (1, TD) constant slab.  o_ref: (TB, TD) output tile."""
    # Sublane broadcast of the constant row across the batch tile, stored
    # lane-dense (TD is a multiple of 128 on this path).
    o_ref[...] = jnp.broadcast_to(const_ref[...], o_ref.shape)


def _sublane_for_itemsize(itemsize):
    # f32 -> 8, bf16 -> 16, int8/fp8 -> 32 rows per vreg (packed sublanes).
    return max(8, 32 // max(1, itemsize))


def _choose_tiles(batch, d, itemsize, sublane, budget=_TILE_BUDGET_BYTES):
    """Pick (batch_tile, lane_tile) for the (batch, d) output.

    Guarantees:
      * lane tile is a multiple of 128 (or the full d),
      * batch tile is a multiple of `sublane` (or the full batch),
      * one output tile fits the per-buffer VMEM budget,
      * >= 2 total grid steps whenever batch >= 2*sublane (megacore on v7x).
    """
    # ---- lane (d) tile: keep full d if a minimal (sublane, d) block fits ----
    if d * itemsize * sublane <= budget:
        td = d
    else:
        td = max(128, (budget // (itemsize * sublane)) // 128 * 128)
    n_d_tiles = pl.cdiv(d, td)

    # ---- batch tile ----
    row_bytes = td * itemsize
    max_rows = max(sublane, (budget // row_bytes) // sublane * sublane)
    tb = batch if batch <= max_rows else max_rows   # full-extent block is legal

    # Megacore: ensure >= 2 grid steps total so both v7x TensorCores get work.
    if n_d_tiles == 1 and batch >= 2 * sublane and pl.cdiv(batch, tb) < 2:
        tb = min(tb, max(sublane, (batch // 2) // sublane * sublane))

    # Prefer a batch tile that divides batch -> only full (unmasked) tiles.
    # (tb is a multiple of sublane whenever this branch is reachable.)
    if batch % tb != 0:
        for cand in range(tb, sublane - 1, -sublane):
            if batch % cand == 0:
                tb = cand
                break

    return tb, td


def constant_input_forward(x, const_param):
    """ConstantInput.forward: repeat const_param over the batch dim of x.

    x           : any array whose leading dim is the batch size (only shape used)
    const_param : (1, C, H, W) learned constant
    returns     : (batch, C, H, W)
    """
    batch = x.shape[0]
    _, c, h, w = const_param.shape
    d = c * h * w
    dtype = const_param.dtype
    itemsize = jnp.dtype(dtype).itemsize
    total_bytes = batch * d * itemsize

    # XLA fallback: non-lane-dense D (masked vst.msk waste) or tiny problems
    # (launch overhead dominates a <256 KiB write).
    if d % 128 != 0 or total_bytes < _PALLAS_MIN_BYTES:
        return jnp.broadcast_to(const_param, (batch, c, h, w))

    const_flat = const_param.reshape(1, d)          # lane-dense constant slab
    sublane = _sublane_for_itemsize(itemsize)
    tb, td = _choose_tiles(batch, d, itemsize, sublane)
    grid = (pl.cdiv(batch, tb), pl.cdiv(d, td))

    # Explicit VMEM limit: double-buffered output tile + double-buffered
    # constant slab, with generous headroom, capped at v7x physical (64 MiB).
    needed = 2 * tb * td * itemsize + 2 * td * itemsize
    vmem_limit = int(min(64 << 20, max(32 << 20, 2 * needed)))

    out_flat = pl.pallas_call(
        _constant_input_kernel,
        out_shape=jax.ShapeDtypeStruct((batch, d), dtype),
        grid_spec=pltpu.PrefetchScalarGridSpec(
            num_scalar_prefetch=0,
            grid=grid,
            in_specs=[
                # Constant slab: index_map only depends on the lane-grid index,
                # so it is not re-DMA'd across batch steps.
                pl.BlockSpec((1, td), lambda i, j: (0, j)),
            ],
            out_specs=pl.BlockSpec((tb, td), lambda i, j: (i, j)),
        ),
        compiler_params=pltpu.CompilerParams(
            # Every tile is an independent write -> both axes megacore-shardable.
            dimension_semantics=("parallel", "parallel"),
            vmem_limit_bytes=vmem_limit,
        ),
        cost_estimate=pl.CostEstimate(
            flops=0,
            transcendentals=0,
            bytes_accessed=(d + batch * d) * itemsize,
        ),
    )(const_flat)

    # Metadata-only reshape back to NCHW (row-major contiguous).
    return out_flat.reshape(batch, c, h, w)


def _reference(x, const_param):
    batch = x.shape[0]
    return jnp.broadcast_to(const_param, (batch,) + const_param.shape[1:])


if __name__ == "__main__":
    key = jax.random.PRNGKey(0)
    keys = jax.random.split(key, 8)

    # --- Config 1: module defaults size=(1, 4) -> D = 16, tiny -> XLA fallback ---
    B, C, H, W = 2, 4, 1, 4
    const1 = jax.random.normal(keys[0], (1, C, H, W), dtype=jnp.float32)
    x1 = jax.random.normal(keys[1], (B, 32), dtype=jnp.float32)
    out1 = jax.block_until_ready(constant_input_forward(x1, const1))
    assert out1.shape == (B, C, H, W), out1.shape
    assert jnp.array_equal(out1, _reference(x1, const1))

    # --- Config 2: StyleGAN-like constant -> lane-dense Pallas path, 2 batch tiles ---
    B2, C2, H2, W2 = 16, 512, 4, 4                  # D = 8192 (64 * 128)
    const2 = jax.random.normal(keys[2], (1, C2, H2, W2), dtype=jnp.float32)
    x2 = jax.random.normal(keys[3], (B2, 32), dtype=jnp.float32)
    out2 = jax.block_until_ready(constant_input_forward(x2, const2))
    assert out2.shape == (B2, C2, H2, W2), out2.shape
    assert jnp.array_equal(out2, _reference(x2, const2))

    # --- Config 3: ragged batch (masked last tile) on the Pallas path ---
    B3, C3, H3, W3 = 20, 384, 4, 4                  # D = 6144 (48 * 128), batch % 8 != 0
    const3 = jax.random.normal(keys[4], (1, C3, H3, W3), dtype=jnp.float32)
    x3 = jax.random.normal(keys[5], (B3, 32), dtype=jnp.float32)
    out3 = jax.block_until_ready(constant_input_forward(x3, const3))
    assert out3.shape == (B3, C3, H3, W3), out3.shape
    assert jnp.array_equal(out3, _reference(x3, const3))

    # --- Config 4: bf16 constant (sublane = 16) on the Pallas path ---
    B4, C4, H4, W4 = 32, 512, 4, 4                  # D = 8192
    const4 = jax.random.normal(keys[6], (1, C4, H4, W4), dtype=jnp.float32).astype(jnp.bfloat16)
    x4 = jax.random.normal(keys[7], (B4, 32), dtype=jnp.float32)
    out4 = jax.block_until_ready(constant_input_forward(x4, const4))
    assert out4.shape == (B4, C4, H4, W4), out4.shape
    assert jnp.array_equal(out4, _reference(x4, const4))

    print("KERNEL_OK")
</pallas_src>

<mosaic_0001>
module attributes {stable_mosaic.version = 11 : i64} {
  func.func @_constant_input_kernel(%arg0: i32, %arg1: i32, %arg2: memref<1x8192xf32, #tpu.memory_space<vmem>>, %arg3: memref<8x8192xf32, #tpu.memory_space<vmem>>) attributes {dimension_semantics = [#tpu.dimension_semantics<parallel>, #tpu.dimension_semantics<parallel>], iteration_bounds = array<i64: 2, 1>, scalar_prefetch = 0 : i64, scratch_operands = 0 : i64, tpu.core_type = #tpu.core_type<tc>, window_params = [{transform_indices = @transform_0, window_bounds = array<i64: 1, 8192>}, {transform_indices = @transform_1, window_bounds = array<i64: 8, 8192>}]} {
    %c0 = arith.constant 0 : index
    %c0_0 = arith.constant 0 : index
    %0 = vector.load %arg2[%c0, %c0_0] : memref<1x8192xf32, #tpu.memory_space<vmem>>, vector<1x8192xf32>
    %1 = vector.shape_cast %0 : vector<1x8192xf32> to vector<1x8192xf32>
    %2 = vector.broadcast %1 : vector<1x8192xf32> to vector<8x8192xf32>
    %c0_1 = arith.constant 0 : index
    %c0_2 = arith.constant 0 : index
    %3 = vector.load %arg3[%c0_1, %c0_2] : memref<8x8192xf32, #tpu.memory_space<vmem>>, vector<8x8192xf32>
    tpu.vector_store %arg3[%c0_1, %c0_2], %2 {strides = array<i32>} : memref<8x8192xf32, #tpu.memory_space<vmem>>, vector<8x8192xf32>,
    return
  }
  func.func @transform_0(%arg0: i32, %arg1: i32) -> (i32, i32) {
    %c0_i32 = arith.constant 0 : i32
    %c0_i32_0 = arith.constant 0 : i32
    return %c0_i32, %arg1 : i32, i32
  }
  func.func @transform_1(%arg0: i32, %arg1: i32) -> (i32, i32) {
    %c0_i32 = arith.constant 0 : i32
    return %arg0, %arg1 : i32, i32
  }
}

</mosaic_0001>

<llo_original>
// kernel: tpu_custom_call.1
$region0: #{tpu_custom_call.1}
  #allocation0 [shape = 'u32[]', space=smem, size = 0x4, offset = 0x4, fixed_abs, tag = 'smem constant byte address 0x4 - core index']
  #allocation1 [shape = 'u32[144,128]{1,0:T(1,128)}', space=vmem, size = 0x12000, scoped, tag = 'internal scratch']
  %s0 = inlined_call_operand.hbm [shape: f32[1,8192], index: 0, kind: input, shape index: {}]
  %s1 = inlined_call_operand.hbm [shape: f32[16,8192], index: 1, kind: output, shape index: {}]
  %s2 = sld [smem:[#allocation0]]
  $region41: #{tpu_custom_call.1} parent=0
    _
  %s4 = ssub.s32 1, %s2
  %s5 = scalar_select 0, %s4, %s2
  $region1: #{tpu_custom_call.1} parent=0
    #allocation2 [shape = 'u8[32768]{0}', space=vmem, size = 0x8000, scoped, tag = 'input window, operand 0, single buffered']
    #allocation3 [shape = 's32[2]{0}', space=sflag, size = 0x8, scoped, tag = 'scoped memory for tpu_custom_call.1']
    #allocation4 [shape = 's32[2]{0}', space=sflag, size = 0x8, scoped, tag = 'scoped memory for tpu_custom_call.1']
    #allocation5 [shape = 'u8[524288]{0}', space=vmem, size = 0x80000, scoped, tag = 'output window, operand 0']
    %6 = vsyncpa [#allocation3], 0
    %7 = vsyncpa [#allocation4], 0
    %s8 = scalar_lea.sflag [#allocation4], 1
    %9 = vsyncpa %s8, 0
    loop: start=0, step=1, limit=4
    $region2: #{tpu_custom_call.1} parent=1 // loop_pre_header
      _
    $region3: #{tpu_custom_call.1} parent=1 // loop_header
      %s11 = sphi 0, %s15
      %p12 = scmp.ge.s32.totalorder %s11, 4
      %s18 = sphi 0, %s30
      %s19 = sphi 0, %s26
      %s20 = sphi 0, %s18
      %s21 = sphi 0, %s19
      %s22 = sphi 0, %s20
      %s23 = sphi 0, %s21
      %s33 = sphi 0, %s35
      %s36 = sphi 0, %s33
      %s37 = sphi 0, %s36
      %s53 = sphi 0, %s37
      %s61 = sphi 0, %s63
      %s64 = sphi 0, %s61
      %s65 = sphi 0, %s64
      %s81 = sphi 0, %s65
    $region4: #{tpu_custom_call.1} parent=1 // loop_header_branch
      %14 = sbr.rel (%p12) target = $region8
    $region5: #{tpu_custom_call.1} parent=1 // loop_body
      %s16 = ssub.s32 %s11, 1
      %s17 = ssub.s32 %s11, 2
      %s24 = sadd.s32 1, %s19
      %p25 = scmp.ge.s32.totalorder %s24, 1
      %s26 = scalar_select %p25, 0, %s24
      %s27 = sadd.s32 1, %s18
      %s28 = scalar_select %p25, %s27, %s18
      %p29 = scmp.ge.s32.totalorder %s28, 2
      %s30 = scalar_select %p29, 0, %s28
      %s31 = ssub.s32 %s19, %s26
      %p32 = scmp.eq.s32.totalorder %s31, 0
      %s34 = sadd.s32 %s33, 1
      %s35 = scalar_select %p32, %s33, %s34
      %p38 = pneg %p32
      %p39 = scmp.eq.s32.totalorder %s11, 1
      %p40 = por %p38, %p39
      %p41 = scmp.ne.s32.totalorder %s33, %s36
      %p42 = scmp.eq.s32.totalorder %s11, 0
      %p43 = por %p41, %p42
      %p44 = scmp.ne.s32.totalorder %s33, %s36
      %p45 = scmp.eq.s32.totalorder %s16, 1
      %p46 = por %p44, %p45
      %p47 = scmp.ne.s32.totalorder %s36, %s37
      %p48 = scmp.eq.s32.totalorder %s16, 0
      %p49 = por %p47, %p48
      %p50 = scmp.ne.s32.totalorder %s36, %s37
      %p51 = scmp.eq.s32.totalorder %s17, 1
      %p52 = por %p50, %p51
      %p54 = scmp.ne.s32.totalorder %s37, %s53
      %p55 = scmp.eq.s32.totalorder %s17, 0
      %p56 = por %p54, %p55
      %s57 = ssub.s32 %s18, %s30
      %s58 = ssub.s32 %s19, %s26
      %s59 = sor.u32 %s57, %s58
      %p60 = scmp.eq.s32.totalorder %s59, 0
      %s62 = sadd.s32 %s61, 1
      %s63 = scalar_select %p60, %s61, %s62
      %p66 = pneg %p60
      %p67 = scmp.eq.s32.totalorder %s11, 1
      %p68 = por %p66, %p67
      %p69 = scmp.ne.s32.totalorder %s61, %s64
      %p70 = scmp.eq.s32.totalorder %s11, 0
      %p71 = por %p69, %p70
      %p72 = scmp.ne.s32.totalorder %s61, %s64
      %p73 = scmp.eq.s32.totalorder %s16, 1
      %p74 = por %p72, %p73
      %p75 = scmp.ne.s32.totalorder %s64, %s65
      %p76 = scmp.eq.s32.totalorder %s16, 0
      %p77 = por %p75, %p76
      %p78 = scmp.ne.s32.totalorder %s64, %s65
      %p79 = scmp.eq.s32.totalorder %s17, 1
      %p80 = por %p78, %p79
      %p82 = scmp.ne.s32.totalorder %s65, %s81
      %p83 = scmp.eq.s32.totalorder %s17, 0
      %p84 = por %p82, %p83
      %p85 = scmp.le.s32.totalorder 1, %s11
      %p86 = scmp.lt.s32.totalorder %s11, 3
      %p87 = pnand %p85, %p86
      %p88 = pneg %p87
      // Predicated region
      $region9: #{tpu_custom_call.1} parent=5 // pred_check
        _
      $region10: #{tpu_custom_call.1} parent=5 // pred_check_branch
        %90 = sbr.rel (%p87) target = $region12
      $region11: #{tpu_custom_call.1} parent=5 // pred_region
        %s91 = ssub.s32 %s11, 1
        // Predicated region
        $region13: #{tpu_custom_call.1} parent=11 // pred_check
          %p92 = pneg %p49
        $region14: #{tpu_custom_call.1} parent=11 // pred_check_branch
          %94 = sbr.rel (%p92) target = $region16
        $region15: #{tpu_custom_call.1} parent=11 // pred_region
          %s95 = smul.u32 64, %s21
          %s97 = ssub.s32 1024, 1024
          %98 = vsyncadd [#allocation3], %s97
          %s99 = smul.addr %s95, 16
          %s100 = scalar_lea.hbm %s0, %s99
          %s102 = sshll.u32 [#allocation2], 4
          %s103 = int_to_ptr.vmem [resolvable:$true] %s102
          %105 = dma.hbm_to_vmem [thread:$0]  %s100, 1024, %s103, [#allocation3]
        $region16: #{tpu_custom_call.1} parent=11 // pred_fallthru
          _
      $region12: #{tpu_custom_call.1} parent=5 // pred_fallthru
        _
      %p106 = scmp.lt.s32.totalorder %s11, 2
      // Predicated region
      $region17: #{tpu_custom_call.1} parent=5 // pred_check
        %p107 = pneg %p106
      $region18: #{tpu_custom_call.1} parent=5 // pred_check_branch
        %109 = sbr.rel (%p107) target = $region20
      $region19: #{tpu_custom_call.1} parent=5 // pred_region
        _
      $region20: #{tpu_custom_call.1} parent=5 // pred_fallthru
        _
      %p110 = scmp.le.s32.totalorder 1, %s11
      %p111 = scmp.lt.s32.totalorder %s11, 3
      %p112 = pnand %p110, %p111
      %p113 = pneg %p112
      // Predicated region
      $region21: #{tpu_custom_call.1} parent=5 // pred_check
        _
      $region22: #{tpu_custom_call.1} parent=5 // pred_check_branch
        %115 = sbr.rel (%p112) target = $region24
      $region23: #{tpu_custom_call.1} parent=5 // pred_region
        %s116 = ssub.s32 %s11, 1
        // Predicated region
        $region25: #{tpu_custom_call.1} parent=23 // pred_check
          %p117 = pneg %p49
        $region26: #{tpu_custom_call.1} parent=23 // pred_check_branch
          %119 = sbr.rel (%p117) target = $region28
        $region27: #{tpu_custom_call.1} parent=23 // pred_region
          %120 = dma.done [#allocation3], 1024
        $region28: #{tpu_custom_call.1} parent=23 // pred_fallthru
          _
        %p121 = pneg %p49
        %p122 = pneg %p46
        %p123 = pneg %p77
        %p124 = pneg %p74
        %s125 = sand.u32 %s64, 1
        %s126 = scalar_lea.sflag [#allocation4], %s125
        %s127 = sand.u32 %s64, 1
        %s128 = smul.addr %s127, 512
        %s129 = scalar_lea.vmem [#allocation5], %s128
        %s130 = smul.u32 64, %s21
        %s131 = smul.u32 64, %s21
        %v132 = vld [vmem:[#allocation2] sm:$0xff]
        %v133 = vld [vmem:[#allocation2 + $0x8] sm:$0xff]
        %v134 = vld [vmem:[#allocation2 + $0x10] sm:$0xff]
        %v135 = vld [vmem:[#allocation2 + $0x18] sm:$0xff]
        %v136 = vld [vmem:[#allocation2 + $0x20] sm:$0xff]
        %v137 = vld [vmem:[#allocation2 + $0x28] sm:$0xff]
        %v138 = vld [vmem:[#allocation2 + $0x30] sm:$0xff]
        %v139 = vld [vmem:[#allocation2 + $0x38] sm:$0xff]
        %v148 = vlaneseq
        %v149 = vshrl.u32 %v148, 7
        %v150 = vsub.s32 0, %v149
        %v151 = vrot.slane %v132, %v150
        %v152 = vlaneseq
        %v153 = vshrl.u32 %v152, 7
        %v154 = vsub.s32 1, %v153
        %v155 = vrot.slane %v132, %v154
        %v156 = vlaneseq
        %v157 = vshrl.u32 %v156, 7
        %v158 = vsub.s32 2, %v157
        %v159 = vrot.slane %v132, %v158
        %v160 = vlaneseq
        %v161 = vshrl.u32 %v160, 7
        %v162 = vsub.s32 3, %v161
        %v163 = vrot.slane %v132, %v162
        %v164 = vlaneseq
        %v165 = vshrl.u32 %v164, 7
        %v166 = vsub.s32 4, %v165
        %v167 = vrot.slane %v132, %v166
        %v168 = vlaneseq
        %v169 = vshrl.u32 %v168, 7
        %v170 = vsub.s32 5, %v169
        %v171 = vrot.slane %v132, %v170
        %v172 = vlaneseq
        %v173 = vshrl.u32 %v172, 7
        %v174 = vsub.s32 6, %v173
        %v175 = vrot.slane %v132, %v174
        %v176 = vlaneseq
        %v177 = vshrl.u32 %v176, 7
        %v178 = vsub.s32 7, %v177
        %v179 = vrot.slane %v132, %v178
        %v180 = vlaneseq
        %v181 = vshrl.u32 %v180, 7
        %v182 = vsub.s32 0, %v181
        %v183 = vrot.slane %v133, %v182
        %v184 = vlaneseq
        %v185 = vshrl.u32 %v184, 7
        %v186 = vsub.s32 1, %v185
        %v187 = vrot.slane %v133, %v186
        %v188 = vlaneseq
        %v189 = vshrl.u32 %v188, 7
        %v190 = vsub.s32 2, %v189
        %v191 = vrot.slane %v133, %v190
        %v192 = vlaneseq
        %v193 = vshrl.u32 %v192, 7
        %v194 = vsub.s32 3, %v193
        %v195 = vrot.slane %v133, %v194
        %v196 = vlaneseq
        %v197 = vshrl.u32 %v196, 7
        %v198 = vsub.s32 4, %v197
        %v199 = vrot.slane %v133, %v198
        %v200 = vlaneseq
        %v201 = vshrl.u32 %v200, 7
        %v202 = vsub.s32 5, %v201
        %v203 = vrot.slane %v133, %v202
        %v204 = vlaneseq
        %v205 = vshrl.u32 %v204, 7
        %v206 = vsub.s32 6, %v205
        %v207 = vrot.slane %v133, %v206
        %v208 = vlaneseq
        %v209 = vshrl.u32 %v208, 7
        %v210 = vsub.s32 7, %v209
        %v211 = vrot.slane %v133, %v210
        %v212 = vlaneseq
        %v213 = vshrl.u32 %v212, 7
        %v214 = vsub.s32 0, %v213
        %v215 = vrot.slane %v134, %v214
        %v216 = vlaneseq
        %v217 = vshrl.u32 %v216, 7
        %v218 = vsub.s32 1, %v217
        %v219 = vrot.slane %v134, %v218
        %v220 = vlaneseq
        %v221 = vshrl.u32 %v220, 7
        %v222 = vsub.s32 2, %v221
        %v223 = vrot.slane %v134, %v222
        %v224 = vlaneseq
        %v225 = vshrl.u32 %v224, 7
        %v226 = vsub.s32 3, %v225
        %v227 = vrot.slane %v134, %v226
        %v228 = vlaneseq
        %v229 = vshrl.u32 %v228, 7
        %v230 = vsub.s32 4, %v229
        %v231 = vrot.slane %v134, %v230
        %v232 = vlaneseq
        %v233 = vshrl.u32 %v232, 7
        %v234 = vsub.s32 5, %v233
        %v235 = vrot.slane %v134, %v234
        %v236 = vlaneseq
        %v237 = vshrl.u32 %v236, 7
        %v238 = vsub.s32 6, %v237
        %v239 = vrot.slane %v134, %v238
        %v240 = vlaneseq
        %v241 = vshrl.u32 %v240, 7
        %v242 = vsub.s32 7, %v241
        %v243 = vrot.slane %v134, %v242
        %v244 = vlaneseq
        %v245 = vshrl.u32 %v244, 7
        %v246 = vsub.s32 0, %v245
        %v247 = vrot.slane %v135, %v246
        %v248 = vlaneseq
        %v249 = vshrl.u32 %v248, 7
        %v250 = vsub.s32 1, %v249
        %v251 = vrot.slane %v135, %v250
        %v252 = vlaneseq
        %v253 = vshrl.u32 %v252, 7
        %v254 = vsub.s32 2, %v253
        %v255 = vrot.slane %v135, %v254
        %v256 = vlaneseq
        %v257 = vshrl.u32 %v256, 7
        %v258 = vsub.s32 3, %v257
        %v259 = vrot.slane %v135, %v258
        %v260 = vlaneseq
        %v261 = vshrl.u32 %v260, 7
        %v262 = vsub.s32 4, %v261
        %v263 = vrot.slane %v135, %v262
        %v264 = vlaneseq
        %v265 = vshrl.u32 %v264, 7
        %v266 = vsub.s32 5, %v265
        %v267 = vrot.slane %v135, %v266
        %v268 = vlaneseq
        %v269 = vshrl.u32 %v268, 7
        %v270 = vsub.s32 6, %v269
        %v271 = vrot.slane %v135, %v270
        %v272 = vlaneseq
        %v273 = vshrl.u32 %v272, 7
        %v274 = vsub.s32 7, %v273
        %v275 = vrot.slane %v135, %v274
        %v276 = vlaneseq
        %v277 = vshrl.u32 %v276, 7
        %v278 = vsub.s32 0, %v277
        %v279 = vrot.slane %v136, %v278
        %v280 = vlaneseq
        %v281 = vshrl.u32 %v280, 7
        %v282 = vsub.s32 1, %v281
        %v283 = vrot.slane %v136, %v282
        %v284 = vlaneseq
        %v285 = vshrl.u32 %v284, 7
        %v286 = vsub.s32 2, %v285
        %v287 = vrot.slane %v136, %v286
        %v288 = vlaneseq
        %v289 = vshrl.u32 %v288, 7
        %v290 = vsub.s32 3, %v289
        %v291 = vrot.slane %v136, %v290
        %v292 = vlaneseq
        %v293 = vshrl.u32 %v292, 7
        %v294 = vsub.s32 4, %v293
        %v295 = vrot.slane %v136, %v294
        %v296 = vlaneseq
        %v297 = vshrl.u32 %v296, 7
        %v298 = vsub.s32 5, %v297
        %v299 = vrot.slane %v136, %v298
        %v300 = vlaneseq
        %v301 = vshrl.u32 %v300, 7
        %v302 = vsub.s32 6, %v301
        %v303 = vrot.slane %v136, %v302
        %v304 = vlaneseq
        %v305 = vshrl.u32 %v304, 7
        %v306 = vsub.s32 7, %v305
        %v307 = vrot.slane %v136, %v306
        %v308 = vlaneseq
        %v309 = vshrl.u32 %v308, 7
        %v310 = vsub.s32 0, %v309
        %v311 = vrot.slane %v137, %v310
        %v312 = vlaneseq
        %v313 = vshrl.u32 %v312, 7
        %v314 = vsub.s32 1, %v313
        %v315 = vrot.slane %v137, %v314
        %v316 = vlaneseq
        %v317 = vshrl.u32 %v316, 7
        %v318 = vsub.s32 2, %v317
        %v319 = vrot.slane %v137, %v318
        %v320 = vlaneseq
        %v321 = vshrl.u32 %v320, 7
        %v322 = vsub.s32 3, %v321
        %v323 = vrot.slane %v137, %v322
        %v324 = vlaneseq
        %v325 = vshrl.u32 %v324, 7
        %v326 = vsub.s32 4, %v325
        %v327 = vrot.slane %v137, %v326
        %v328 = vlaneseq
        %v329 = vshrl.u32 %v328, 7
        %v330 = vsub.s32 5, %v329
        %v331 = vrot.slane %v137, %v330
        %v332 = vlaneseq
        %v333 = vshrl.u32 %v332, 7
        %v334 = vsub.s32 6, %v333
        %v335 = vrot.slane %v137, %v334
        %v336 = vlaneseq
        %v337 = vshrl.u32 %v336, 7
        %v338 = vsub.s32 7, %v337
        %v339 = vrot.slane %v137, %v338
        %v340 = vlaneseq
        %v341 = vshrl.u32 %v340, 7
        %v342 = vsub.s32 0, %v341
        %v343 = vrot.slane %v138, %v342
        %v344 = vlaneseq
        %v345 = vshrl.u32 %v344, 7
        %v346 = vsub.s32 1, %v345
        %v347 = vrot.slane %v138, %v346
        %v348 = vlaneseq
        %v349 = vshrl.u32 %v348, 7
        %v350 = vsub.s32 2, %v349
        %v351 = vrot.slane %v138, %v350
        %v352 = vlaneseq
        %v353 = vshrl.u32 %v352, 7
        %v354 = vsub.s32 3, %v353
        %v355 = vrot.slane %v138, %v354
        %v356 = vlaneseq
        %v357 = vshrl.u32 %v356, 7
        %v358 = vsub.s32 4, %v357
        %v359 = vrot.slane %v138, %v358
        %v360 = vlaneseq
        %v361 = vshrl.u32 %v360, 7
        %v362 = vsub.s32 5, %v361
        %v363 = vrot.slane %v138, %v362
        %v364 = vlaneseq
        %v365 = vshrl.u32 %v364, 7
        %v366 = vsub.s32 6, %v365
        %v367 = vrot.slane %v138, %v366
        %v368 = vlaneseq
        %v369 = vshrl.u32 %v368, 7
        %v370 = vsub.s32 7, %v369
        %v371 = vrot.slane %v138, %v370
        %v372 = vlaneseq
        %v373 = vshrl.u32 %v372, 7
        %v374 = vsub.s32 0, %v373
        %v375 = vrot.slane %v139, %v374
        %v376 = vlaneseq
        %v377 = vshrl.u32 %v376, 7
        %v378 = vsub.s32 1, %v377
        %v379 = vrot.slane %v139, %v378
        %v380 = vlaneseq
        %v381 = vshrl.u32 %v380, 7
        %v382 = vsub.s32 2, %v381
        %v383 = vrot.slane %v139, %v382
        %v384 = vlaneseq
        %v385 = vshrl.u32 %v384, 7
        %v386 = vsub.s32 3, %v385
        %v387 = vrot.slane %v139, %v386
        %v388 = vlaneseq
        %v389 = vshrl.u32 %v388, 7
        %v390 = vsub.s32 4, %v389
        %v391 = vrot.slane %v139, %v390
        %v392 = vlaneseq
        %v393 = vshrl.u32 %v392, 7
        %v394 = vsub.s32 5, %v393
        %v395 = vrot.slane %v139, %v394
        %v396 = vlaneseq
        %v397 = vshrl.u32 %v396, 7
        %v398 = vsub.s32 6, %v397
        %v399 = vrot.slane %v139, %v398
        %v400 = vlaneseq
        %v401 = vshrl.u32 %v400, 7
        %v402 = vsub.s32 7, %v401
        %v403 = vrot.slane %v139, %v402
        %468 = vst [vmem:[%s129] sm:$0xff] %v151
        %469 = vst [vmem:[%s129 + $0x8] sm:$0xff] %v155
        %470 = vst [vmem:[%s129 + $0x10] sm:$0xff] %v159
        %471 = vst [vmem:[%s129 + $0x18] sm:$0xff] %v163
        %472 = vst [vmem:[%s129 + $0x20] sm:$0xff] %v167
        %473 = vst [vmem:[%s129 + $0x28] sm:$0xff] %v171
        %474 = vst [vmem:[%s129 + $0x30] sm:$0xff] %v175
        %475 = vst [vmem:[%s129 + $0x38] sm:$0xff] %v179
        %476 = vst [vmem:[%s129 + $0x40] sm:$0xff] %v183
        %477 = vst [vmem:[%s129 + $0x48] sm:$0xff] %v187
        %478 = vst [vmem:[%s129 + $0x50] sm:$0xff] %v191
        %479 = vst [vmem:[%s129 + $0x58] sm:$0xff] %v195
        %480 = vst [vmem:[%s129 + $0x60] sm:$0xff] %v199
        %481 = vst [vmem:[%s129 + $0x68] sm:$0xff] %v203
        %482 = vst [vmem:[%s129 + $0x70] sm:$0xff] %v207
        %483 = vst [vmem:[%s129 + $0x78] sm:$0xff] %v211
        %484 = vst [vmem:[%s129 + $0x80] sm:$0xff] %v215
        %485 = vst [vmem:[%s129 + $0x88] sm:$0xff] %v219
        %486 = vst [vmem:[%s129 + $0x90] sm:$0xff] %v223
        %487 = vst [vmem:[%s129 + $0x98] sm:$0xff] %v227
        %488 = vst [vmem:[%s129 + $0xa0] sm:$0xff] %v231
        %489 = vst [vmem:[%s129 + $0xa8] sm:$0xff] %v235
        %490 = vst [vmem:[%s129 + $0xb0] sm:$0xff] %v239
        %491 = vst [vmem:[%s129 + $0xb8] sm:$0xff] %v243
        %492 = vst [vmem:[%s129 + $0xc0] sm:$0xff] %v247
        %493 = vst [vmem:[%s129 + $0xc8] sm:$0xff] %v251
        %494 = vst [vmem:[%s129 + $0xd0] sm:$0xff] %v255
        %495 = vst [vmem:[%s129 + $0xd8] sm:$0xff] %v259
        %496 = vst [vmem:[%s129 + $0xe0] sm:$0xff] %v263
        %497 = vst [vmem:[%s129 + $0xe8] sm:$0xff] %v267
        %498 = vst [vmem:[%s129 + $0xf0] sm:$0xff] %v271
        %499 = vst [vmem:[%s129 + $0xf8] sm:$0xff] %v275
        %500 = vst [vmem:[%s129 + $0x100] sm:$0xff] %v279
        %501 = vst [vmem:[%s129 + $0x108] sm:$0xff] %v283
        %502 = vst [vmem:[%s129 + $0x110] sm:$0xff] %v287
        %503 = vst [vmem:[%s129 + $0x118] sm:$0xff] %v291
        %504 = vst [vmem:[%s129 + $0x120] sm:$0xff] %v295
        %505 = vst [vmem:[%s129 + $0x128] sm:$0xff] %v299
        %506 = vst [vmem:[%s129 + $0x130] sm:$0xff] %v303
        %507 = vst [vmem:[%s129 + $0x138] sm:$0xff] %v307
        %508 = vst [vmem:[%s129 + $0x140] sm:$0xff] %v311
        %509 = vst [vmem:[%s129 + $0x148] sm:$0xff] %v315
        %510 = vst [vmem:[%s129 + $0x150] sm:$0xff] %v319
        %511 = vst [vmem:[%s129 + $0x158] sm:$0xff] %v323
        %512 = vst [vmem:[%s129 + $0x160] sm:$0xff] %v327
        %513 = vst [vmem:[%s129 + $0x168] sm:$0xff] %v331
        %514 = vst [vmem:[%s129 + $0x170] sm:$0xff] %v335
        %515 = vst [vmem:[%s129 + $0x178] sm:$0xff] %v339
        %516 = vst [vmem:[%s129 + $0x180] sm:$0xff] %v343
        %517 = vst [vmem:[%s129 + $0x188] sm:$0xff] %v347
        %518 = vst [vmem:[%s129 + $0x190] sm:$0xff] %v351
        %519 = vst [vmem:[%s129 + $0x198] sm:$0xff] %v355
        %520 = vst [vmem:[%s129 + $0x1a0] sm:$0xff] %v359
        %521 = vst [vmem:[%s129 + $0x1a8] sm:$0xff] %v363
        %522 = vst [vmem:[%s129 + $0x1b0] sm:$0xff] %v367
        %523 = vst [vmem:[%s129 + $0x1b8] sm:$0xff] %v371
        %524 = vst [vmem:[%s129 + $0x1c0] sm:$0xff] %v375
        %525 = vst [vmem:[%s129 + $0x1c8] sm:$0xff] %v379
        %526 = vst [vmem:[%s129 + $0x1d0] sm:$0xff] %v383
        %527 = vst [vmem:[%s129 + $0x1d8] sm:$0xff] %v387
        %528 = vst [vmem:[%s129 + $0x1e0] sm:$0xff] %v391
        %529 = vst [vmem:[%s129 + $0x1e8] sm:$0xff] %v395
        %530 = vst [vmem:[%s129 + $0x1f0] sm:$0xff] %v399
        %531 = vst [vmem:[%s129 + $0x1f8] sm:$0xff] %v403
        %s532 = sand.u32 %s64, 1
        %s533 = scalar_lea.sflag [#allocation4], %s532
        %s534 = sand.u32 %s64, 1
        %s535 = smul.addr %s534, 512
        %s536 = scalar_lea.vmem [#allocation5], %s535
        // Predicated region
        $region29: #{tpu_custom_call.1} parent=23 // pred_check
          %p537 = pneg %p74
        $region30: #{tpu_custom_call.1} parent=23 // pred_check_branch
          %539 = sbr.rel (%p537) target = $region32
        $region31: #{tpu_custom_call.1} parent=23 // pred_region
          %s540 = smul.u32 64, %s21
          %s542 = ssub.s32 8192, 8192
          %543 = vsyncadd %s533, %s542
          %s544 = smul.addr %s20, 64
          %s545 = sadd.s32 %s540, %s544
          %s546 = smul.addr %s545, 128
          %s547 = scalar_lea.hbm %s1, %s546
          %s549 = sshll.u32 %s536, 4
          %s550 = int_to_ptr.vmem [resolvable:$true] %s549
          %552 = dma.vmem_to_hbm [thread:$0]  %s550, 8192, %s547, %s533
        $region32: #{tpu_custom_call.1} parent=23 // pred_fallthru
          _
      $region24: #{tpu_custom_call.1} parent=5 // pred_fallthru
        _
      %p553 = scmp.le.s32.totalorder 2, %s11
      // Predicated region
      $region33: #{tpu_custom_call.1} parent=5 // pred_check
        %p554 = pneg %p553
      $region34: #{tpu_custom_call.1} parent=5 // pred_check_branch
        %556 = sbr.rel (%p554) target = $region36
      $region35: #{tpu_custom_call.1} parent=5 // pred_region
        %s557 = ssub.s32 %s11, 2
        // Predicated region
        $region37: #{tpu_custom_call.1} parent=35 // pred_check
          %p558 = pneg %p80
        $region38: #{tpu_custom_call.1} parent=35 // pred_check_branch
          %560 = sbr.rel (%p558) target = $region40
        $region39: #{tpu_custom_call.1} parent=35 // pred_region
          %s561 = sand.u32 %s65, 1
          %s562 = scalar_lea.sflag [#allocation4], %s561
          %s563 = sand.u32 %s65, 1
          %s564 = smul.addr %s563, 512
          %s565 = scalar_lea.vmem [#allocation5], %s564
          %566 = dma.done %s562, 8192
        $region40: #{tpu_custom_call.1} parent=35 // pred_fallthru
          _
      $region36: #{tpu_custom_call.1} parent=5 // pred_fallthru
        _
    $region6: #{tpu_custom_call.1} parent=1 // loop_footer
      %s15 = sadd.s32 1, %s11
    $region7: #{tpu_custom_call.1} parent=1 // loop_footer_branch
      %10 = sbr.rel target = $region3
    $region8: #{tpu_custom_call.1} parent=1 // loop_exit
      _
    %567 = vsyncpa [#allocation3], 1
    %s568 = scalar_lea.sflag [#allocation3], 1
    %569 = vsyncpa %s568, 1
    %570 = vsyncpa [#allocation4], 1
    %s571 = scalar_lea.sflag [#allocation4], 1
    %572 = vsyncpa %s571, 1

</llo_original>
